<compile_context>
chip_gen: v7x
topology: tpu7x:2x2x1
jax: 0.10.0
libtpu: 0.0.40
codegen_flags: <defaults>
</compile_context>

<pallas_src>
import numpy as np
import jax
import jax.numpy as jnp
from jax.experimental import pallas as pl
from jax.experimental.pallas import tpu as pltpu

MV_DIM = 16          # PGA G(3,0,1) multivector dimension
NUM_BASIS = 9        # Pin(3,0,1)-equivariant linear basis elements
IN_DIM = 8           # main_model.in_dim  (scalar channels in)
OUT_DIM = 8          # main_model.out_dim (mv & scalar channels out)
THRESHOLD = 1e-3     # extract_point embedding-dim clamp
MVW = OUT_DIM * MV_DIM   # 128 flattened multivector feature columns


# ---------------------------------------------------------------------------
# Geometric-algebra constants (done once at setup time)
# ---------------------------------------------------------------------------
def make_basis():
    """9 basis maps of Pin(3,0,1)-equivariant linear maps on multivectors:
    5 grade projections + 4 left-multiplications by e0 restricted to a grade."""
    b = np.zeros((NUM_BASIS, MV_DIM, MV_DIM), np.float32)
    grades = {0: [0], 1: [1, 2, 3, 4], 2: [5, 6, 7, 8, 9, 10],
              3: [11, 12, 13, 14], 4: [15]}
    for g, idxs in grades.items():
        for i in idxs:
            b[g, i, i] = 1.0
    # e0 * <x>_0 .. e0 * <x>_3
    b[5, 1, 0] = 1.0
    b[6, 5, 2] = 1.0; b[6, 6, 3] = 1.0; b[6, 7, 4] = 1.0
    b[7, 11, 8] = 1.0; b[7, 12, 9] = 1.0; b[7, 13, 10] = 1.0
    b[8, 15, 14] = 1.0
    return jnp.asarray(b)


def embed_point(pos):
    """pos: (N, 3) -> multivector (N, 16); trivector embedding of a 3D point.
    (Used only by the plain-JAX reference; the kernel folds this into the weights.)"""
    n = pos.shape[0]
    mv = jnp.zeros((n, MV_DIM), pos.dtype)
    mv = mv.at[:, 14].set(1.0)          # homogeneous coordinate (e123)
    mv = mv.at[:, 13].set(-pos[:, 0])   # x -> e023
    mv = mv.at[:, 12].set(pos[:, 1])    # y -> e013
    mv = mv.at[:, 11].set(-pos[:, 2])   # z -> e012
    return mv


# ---------------------------------------------------------------------------
# Parameter construction (deterministic, synthetic)
# ---------------------------------------------------------------------------
def init_equilinear(key, cin_mv, cout_mv, cin_s, cout_s, scale=0.2):
    ks = jax.random.split(key, 6)
    return dict(
        w_mv=jax.random.normal(ks[0], (cout_mv, cin_mv, NUM_BASIS), jnp.float32) * scale,
        w_s2mv=jax.random.normal(ks[1], (cout_mv, cin_s), jnp.float32) * scale,
        w_mv2s=jax.random.normal(ks[2], (cout_s, cin_mv), jnp.float32) * scale,
        w_s2s=jax.random.normal(ks[3], (cout_s, cin_s), jnp.float32) * scale,
        b_mv=jax.random.normal(ks[4], (cout_mv,), jnp.float32) * scale,
        b_s=jax.random.normal(ks[5], (cout_s,), jnp.float32) * scale,
    )


def combined_weight(p, cin_mv, cout_mv, cin_s, cout_s, basis):
    """Fold an EquiLinear layer into one (Din, Dout) matrix + (1, Dout) bias
    acting on the flattened [mv_channels*16 | scalar_channels] feature layout."""
    din = cin_mv * MV_DIM + cin_s
    dout = cout_mv * MV_DIM + cout_s
    # mv -> mv via the 9-element equivariant basis:
    #   out[n, y*16+i] = sum_{x,a,j} w[y,x,a] basis[a,i,j] in[n, x*16+j]
    Wmm = jnp.einsum('yxa,aij->xjyi', p['w_mv'], basis).reshape(
        cin_mv * MV_DIM, cout_mv * MV_DIM)
    W = jnp.zeros((din, dout), jnp.float32)
    W = W.at[:cin_mv * MV_DIM, :cout_mv * MV_DIM].set(Wmm)

    mv0_out_cols = jnp.arange(cout_mv) * MV_DIM                 # component-0 cols
    mv0_in_rows = jnp.arange(cin_mv) * MV_DIM
    s_rows = cin_mv * MV_DIM + jnp.arange(cin_s)
    s_cols = cout_mv * MV_DIM + jnp.arange(cout_s)

    W = W.at[s_rows[:, None], mv0_out_cols[None, :]].set(p['w_s2mv'].T)  # s -> mv[...,0]
    W = W.at[mv0_in_rows[:, None], s_cols[None, :]].set(p['w_mv2s'].T)   # mv[...,0] -> s
    W = W.at[s_rows[:, None], s_cols[None, :]].set(p['w_s2s'].T)         # s -> s

    b = jnp.zeros((dout,), jnp.float32)
    b = b.at[mv0_out_cols].set(p['b_mv'])   # embed_scalar(bias): component 0 only
    b = b.at[s_cols].set(p['b_s'])
    return W, b.reshape(1, dout)


def build_folded_weights(params):
    """Fold the whole forward pass (offline) into:
       wu_t (32,3), bu (32,1)  -> u channels  (index h*4+c)
       wg_t (32,3), bg (32,1)  -> gate args, replicated 4x per channel
       st   (4,32)             -> 0/1 sum-over-channels matrix."""
    basis = make_basis()
    W0, b0 = combined_weight(params['main'], 1, OUT_DIM, IN_DIM, OUT_DIM, basis)          # (24,136)
    W1, b1 = combined_weight(params['head1'], OUT_DIM, OUT_DIM, OUT_DIM, OUT_DIM, basis)  # (136,136)
    W2, b2 = combined_weight(params['head2'], OUT_DIM, 1, OUT_DIM, 1, basis)              # (136,17)

    # --- fold embed_point + zero scalar features into W0 ---------------------
    # embed_point: mv[11] = -z, mv[12] = y, mv[13] = -x, mv[14] = 1, rest 0;
    # scalar inputs are identically zero so their rows of W0 drop out.
    W0_eff = jnp.stack([-W0[13], W0[12], -W0[11]], axis=0)          # (3, 136)
    b0_eff = (W0[14] + b0[0]).reshape(1, -1)                        # (1, 136)

    # --- fold the (linear placeholder) main block into head1 -----------------
    # TODO(synk): this fold is only valid while main_model is the linear
    # synthetic EquiLinear placeholder (no nonlinearity in between).
    W01 = W0_eff @ W1                                               # (3, 136)
    b01 = b0_eff @ W1 + b1                                          # (1, 136)

    # --- fold head2 + extract_point -------------------------------------------
    # Only mv components 11..14 of head2's single output channel are live:
    #   numerator = [-mv13, mv12, -mv11], denominator = mv14 (clamped).
    # head2's scalar inputs and biases only write mv component 0 and the scalar
    # output, so those rows/terms (and b2) vanish under this projection.
    ext = jnp.zeros((MV_DIM + 1, 4), jnp.float32)
    ext = ext.at[13, 0].set(-1.0)
    ext = ext.at[12, 1].set(1.0)
    ext = ext.at[11, 2].set(-1.0)
    ext = ext.at[14, 3].set(1.0)
    w2e = W2[:MVW] @ ext                                            # (128, 4); b2 @ ext == 0

    # --- fold the scalar-gate redundancy + head2 into per-channel scalars ----
    # gate for channel h is mv component 0 of that channel (one value / node);
    # z[n,c] = sum_h gelu(g[n,h]) * (pos[n,:]@A[:,h,c] + B[h,c]).
    Wmv = W01[:, :MVW].reshape(3, OUT_DIM, MV_DIM)                  # (3,8,16)
    bmv = b01[0, :MVW].reshape(OUT_DIM, MV_DIM)                     # (8,16)
    w2e_r = w2e.reshape(OUT_DIM, MV_DIM, 4)                         # (8,16,4)

    A = jnp.einsum('dhi,hic->dhc', Wmv, w2e_r)                      # (3,8,4)
    B = jnp.einsum('hi,hic->hc', bmv, w2e_r)                        # (8,4)
    Wg = Wmv[:, :, 0]                                               # (3,8)
    bg = bmv[:, 0]                                                  # (8,)

    wu_t = A.reshape(3, 4 * OUT_DIM).T                              # (32,3), col h*4+c
    bu = B.reshape(4 * OUT_DIM, 1)                                  # (32,1)
    wg_t = jnp.repeat(Wg, 4, axis=1).T                              # (32,3), gate of h at h*4+c
    bgc = jnp.repeat(bg, 4).reshape(4 * OUT_DIM, 1)                 # (32,1)
    st = jnp.tile(jnp.eye(4, dtype=jnp.float32), (1, OUT_DIM))      # (4,32): sum over h
    return wu_t, bu, wg_t, bgc, st


# ---------------------------------------------------------------------------
# Pallas kernel (feature-major / node-lane layout):
#   u = Wu @ posT + bu ; g = Wg @ posT + bg ; gated = gelu(g)*u
#   z = S @ gated ; out = z[:3] / clamp(z[3])
# ---------------------------------------------------------------------------
def cosmology_kernel(pos_ref, wu_ref, bu_ref, wg_ref, bg_ref, st_ref, o_ref):
    p = pos_ref[...]                                                 # (3, TN)
    u = jnp.dot(wu_ref[...], p,
                preferred_element_type=jnp.float32) + bu_ref[...]    # (32, TN)
    g = jnp.dot(wg_ref[...], p,
                preferred_element_type=jnp.float32) + bg_ref[...]    # (32, TN)
    gated = jax.nn.gelu(g) * u                                       # (32, TN)
    z = jnp.dot(st_ref[...], gated,
                preferred_element_type=jnp.float32)                  # (4, TN)
    denom = z[3:4, :]
    denom = jnp.where(jnp.abs(denom) > THRESHOLD, denom,
                      jnp.full_like(denom, THRESHOLD))
    o_ref[...] = z[0:3, :] / denom                                   # (3, TN) lane-dense store


def _round_up(x, m):
    return ((x + m - 1) // m) * m


def cosmology_forward(node_positions, params, *, tile_n=8192):
    """node_positions: (N, 3) float32 -> velocity (N, 3) float32."""
    n = node_positions.shape[0]
    wu, bu, wg, bg, st = build_folded_weights(params)

    # Nodes live on the lane axis: tiles are multiples of 128 lanes, cdiv grid
    # with zero-padding so arbitrary N works (padded nodes are discarded).
    tile = min(tile_n, _round_up(max(n, 1), 128))
    n_pad = _round_up(n, tile)

    pos_t = node_positions.astype(jnp.float32).T                     # (3, N)
    if n_pad != n:
        pos_t = jnp.pad(pos_t, ((0, 0), (0, n_pad - n)))

    full = lambda a: pl.BlockSpec(a.shape, lambda i: (0, 0))

    out_t = pl.pallas_call(
        cosmology_kernel,
        out_shape=jax.ShapeDtypeStruct((3, n_pad), jnp.float32),
        grid_spec=pltpu.PrefetchScalarGridSpec(
            num_scalar_prefetch=0,
            grid=(n_pad // tile,),
            in_specs=[
                pl.BlockSpec((3, tile), lambda i: (0, i)),
                full(wu), full(bu), full(wg), full(bg), full(st),
            ],
            out_specs=pl.BlockSpec((3, tile), lambda i: (0, i)),
        ),
        compiler_params=pltpu.CompilerParams(
            dimension_semantics=("parallel",)),
    )(pos_t, wu, bu, wg, bg, st)

    out_t = out_t[:, :n] if n_pad != n else out_t
    return out_t.T                                                   # (N, 3)


# ---------------------------------------------------------------------------
# Plain-JAX reference (mirrors the PyTorch module op-for-op) for verification
# ---------------------------------------------------------------------------
def reference_forward(node_positions, params):
    basis = make_basis()
    n = node_positions.shape[0]
    mv = embed_point(node_positions).reshape(n, 1, MV_DIM)     # unsqueeze(-2)
    sc = jnp.zeros((n, IN_DIM), node_positions.dtype)

    def equi(p, mv, sc):
        out_mv = jnp.einsum('yxa,aij,nxj->nyi', p['w_mv'], basis, mv)
        out_mv = out_mv.at[..., 0].add(sc @ p['w_s2mv'].T + p['b_mv'])
        out_sc = mv[..., 0] @ p['w_mv2s'].T + sc @ p['w_s2s'].T + p['b_s']
        return out_mv, out_sc

    mv, sc = equi(params['main'], mv, sc)
    mv, sc = equi(params['head1'], mv, sc)
    gates = jax.nn.gelu(mv[..., 0:1])
    mv = gates * mv
    sc = jax.nn.gelu(sc)
    mv, sc = equi(params['head2'], mv, sc)

    coords = jnp.stack([-mv[..., 13], mv[..., 12], -mv[..., 11]], axis=-1)
    emb = mv[..., 14:15]
    emb = jnp.where(jnp.abs(emb) > THRESHOLD, emb, THRESHOLD)
    coords = coords / emb
    return coords[:, 0, :]                                     # squeeze(1) -> (N, 3)


# ---------------------------------------------------------------------------
if __name__ == "__main__":
    key = jax.random.PRNGKey(0)
    k_pos, k_main, k_h1, k_h2 = jax.random.split(key, 4)

    params = {
        'main': init_equilinear(k_main, 1, OUT_DIM, IN_DIM, OUT_DIM),
        'head1': init_equilinear(k_h1, OUT_DIM, OUT_DIM, OUT_DIM, OUT_DIM),
        'head2': init_equilinear(k_h2, OUT_DIM, 1, OUT_DIM, 1),
    }

    # primary check: small, tile-aligned N
    n_nodes = 256
    node_positions = jax.random.normal(k_pos, (n_nodes, 3), jnp.float32)
    vel = jax.block_until_ready(cosmology_forward(node_positions, params))
    assert vel.shape == (n_nodes, 3) and vel.dtype == jnp.float32
    ref = jax.block_until_ready(reference_forward(node_positions, params))
    np.testing.assert_allclose(np.asarray(vel), np.asarray(ref),
                               rtol=2e-3, atol=2e-3)

    # secondary check: N not a multiple of 128 exercises the cdiv/padded path
    n_odd = 100
    pos_odd = node_positions[:n_odd]
    vel_odd = jax.block_until_ready(cosmology_forward(pos_odd, params))
    ref_odd = jax.block_until_ready(reference_forward(pos_odd, params))
    np.testing.assert_allclose(np.asarray(vel_odd), np.asarray(ref_odd),
                               rtol=2e-3, atol=2e-3)

    print("KERNEL_OK")
</pallas_src>

<mosaic_0001>
module attributes {stable_mosaic.version = 11 : i64} {
  func.func @cosmology_kernel(%arg0: i32, %arg1: memref<3x256xf32, #tpu.memory_space<vmem>>, %arg2: memref<32x3xf32, #tpu.memory_space<vmem>>, %arg3: memref<32x1xf32, #tpu.memory_space<vmem>>, %arg4: memref<32x3xf32, #tpu.memory_space<vmem>>, %arg5: memref<32x1xf32, #tpu.memory_space<vmem>>, %arg6: memref<4x32xf32, #tpu.memory_space<vmem>>, %arg7: memref<3x256xf32, #tpu.memory_space<vmem>>) attributes {dimension_semantics = [#tpu.dimension_semantics<parallel>], iteration_bounds = array<i64: 1>, scalar_prefetch = 0 : i64, scratch_operands = 0 : i64, tpu.core_type = #tpu.core_type<tc>, window_params = [{transform_indices = @transform_0, window_bounds = array<i64: 3, 256>}, {pipeline_mode = #tpu.pipeline_mode<synchronous>, transform_indices = @transform_1, window_bounds = array<i64: 32, 3>}, {pipeline_mode = #tpu.pipeline_mode<synchronous>, transform_indices = @transform_2, window_bounds = array<i64: 32, 1>}, {pipeline_mode = #tpu.pipeline_mode<synchronous>, transform_indices = @transform_3, window_bounds = array<i64: 32, 3>}, {pipeline_mode = #tpu.pipeline_mode<synchronous>, transform_indices = @transform_4, window_bounds = array<i64: 32, 1>}, {pipeline_mode = #tpu.pipeline_mode<synchronous>, transform_indices = @transform_5, window_bounds = array<i64: 4, 32>}, {transform_indices = @transform_6, window_bounds = array<i64: 3, 256>}]} {
    %c0 = arith.constant 0 : index
    %c0_0 = arith.constant 0 : index
    %0 = vector.load %arg1[%c0, %c0_0] : memref<3x256xf32, #tpu.memory_space<vmem>>, vector<3x256xf32>
    %c0_1 = arith.constant 0 : index
    %c0_2 = arith.constant 0 : index
    %1 = vector.load %arg2[%c0_1, %c0_2] : memref<32x3xf32, #tpu.memory_space<vmem>>, vector<32x3xf32>
    %cst = arith.constant dense<0.000000e+00> : vector<32x256xf32>
    %2 = tpu.matmul %1, %0, %cst {dimension_numbers = #tpu.dot_dimension_numbers<[1], [0], [0], [1], [0, 0, 1, 1], [], []>} : vector<32x3xf32>, vector<3x256xf32>, vector<32x256xf32> -> vector<32x256xf32>
    %c0_3 = arith.constant 0 : index
    %c0_4 = arith.constant 0 : index
    %3 = vector.load %arg3[%c0_3, %c0_4] : memref<32x1xf32, #tpu.memory_space<vmem>>, vector<32x1xf32>
    %4 = vector.broadcast %3 : vector<32x1xf32> to vector<32x256xf32>
    %5 = arith.addf %2, %4 : vector<32x256xf32>
    %c0_5 = arith.constant 0 : index
    %c0_6 = arith.constant 0 : index
    %6 = vector.load %arg4[%c0_5, %c0_6] : memref<32x3xf32, #tpu.memory_space<vmem>>, vector<32x3xf32>
    %cst_7 = arith.constant dense<0.000000e+00> : vector<32x256xf32>
    %7 = tpu.matmul %6, %0, %cst_7 {dimension_numbers = #tpu.dot_dimension_numbers<[1], [0], [0], [1], [0, 0, 1, 1], [], []>} : vector<32x3xf32>, vector<3x256xf32>, vector<32x256xf32> -> vector<32x256xf32>
    %c0_8 = arith.constant 0 : index
    %c0_9 = arith.constant 0 : index
    %8 = vector.load %arg5[%c0_8, %c0_9] : memref<32x1xf32, #tpu.memory_space<vmem>>, vector<32x1xf32>
    %9 = vector.broadcast %8 : vector<32x1xf32> to vector<32x256xf32>
    %10 = arith.addf %7, %9 : vector<32x256xf32>
    %11 = arith.mulf %10, %10 : vector<32x256xf32>
    %12 = arith.mulf %10, %11 : vector<32x256xf32>
    %cst_10 = arith.constant 4.471500e-02 : f32
    %13 = vector.broadcast %cst_10 : f32 to vector<32x256xf32>
    %14 = arith.mulf %13, %12 : vector<32x256xf32>
    %15 = arith.addf %10, %14 : vector<32x256xf32>
    %cst_11 = arith.constant 0.797884583 : f32
    %16 = vector.broadcast %cst_11 : f32 to vector<32x256xf32>
    %17 = arith.mulf %16, %15 : vector<32x256xf32>
    %18 = math.tanh %17 : vector<32x256xf32>
    %cst_12 = arith.constant 1.000000e+00 : f32
    %19 = vector.broadcast %cst_12 : f32 to vector<32x256xf32>
    %20 = arith.addf %19, %18 : vector<32x256xf32>
    %cst_13 = arith.constant 5.000000e-01 : f32
    %21 = vector.broadcast %cst_13 : f32 to vector<32x256xf32>
    %22 = arith.mulf %21, %20 : vector<32x256xf32>
    %23 = arith.mulf %10, %22 : vector<32x256xf32>
    %24 = arith.mulf %23, %5 : vector<32x256xf32>
    %c0_14 = arith.constant 0 : index
    %c0_15 = arith.constant 0 : index
    %25 = vector.load %arg6[%c0_14, %c0_15] : memref<4x32xf32, #tpu.memory_space<vmem>>, vector<4x32xf32>
    %cst_16 = arith.constant dense<0.000000e+00> : vector<4x256xf32>
    %26 = tpu.matmul %25, %24, %cst_16 {dimension_numbers = #tpu.dot_dimension_numbers<[1], [0], [0], [1], [0, 0, 1, 1], [], []>} : vector<4x32xf32>, vector<32x256xf32>, vector<4x256xf32> -> vector<4x256xf32>
    %27 = vector.extract_strided_slice %26 {offsets = [3, 0], sizes = [1, 256], strides = [1, 1]} : vector<4x256xf32> to vector<1x256xf32>
    %28 = math.absf %27 : vector<1x256xf32>
    %cst_17 = arith.constant 1.000000e-03 : f32
    %29 = vector.broadcast %cst_17 : f32 to vector<1x256xf32>
    %30 = arith.cmpf ogt, %28, %29 : vector<1x256xf32>
    %cst_18 = arith.constant 1.000000e-03 : f32
    %31 = vector.broadcast %cst_18 : f32 to vector<1x256xf32>
    %32 = arith.select %30, %27, %31 : vector<1x256xi1>, vector<1x256xf32>
    %33 = vector.extract_strided_slice %26 {offsets = [0, 0], sizes = [3, 256], strides = [1, 1]} : vector<4x256xf32> to vector<3x256xf32>
    %34 = vector.broadcast %32 : vector<1x256xf32> to vector<3x256xf32>
    %35 = arith.divf %33, %34 : vector<3x256xf32>
    %c0_19 = arith.constant 0 : index
    %c0_20 = arith.constant 0 : index
    %36 = vector.load %arg7[%c0_19, %c0_20] : memref<3x256xf32, #tpu.memory_space<vmem>>, vector<3x256xf32>
    tpu.vector_store %arg7[%c0_19, %c0_20], %35 {strides = array<i32>} : memref<3x256xf32, #tpu.memory_space<vmem>>, vector<3x256xf32>,
    return
  }
  func.func @transform_0(%arg0: i32) -> (i32, i32) {
    %c0_i32 = arith.constant 0 : i32
    %c0_i32_0 = arith.constant 0 : i32
    return %c0_i32, %arg0 : i32, i32
  }
  func.func @transform_1(%arg0: i32) -> (i32, i32) {
    %c0_i32 = arith.constant 0 : i32
    %c0_i32_0 = arith.constant 0 : i32
    %c0_i32_1 = arith.constant 0 : i32
    return %c0_i32, %c0_i32_0 : i32, i32
  }
  func.func @transform_2(%arg0: i32) -> (i32, i32) {
    %c0_i32 = arith.constant 0 : i32
    %c0_i32_0 = arith.constant 0 : i32
    %c0_i32_1 = arith.constant 0 : i32
    return %c0_i32, %c0_i32_0 : i32, i32
  }
  func.func @transform_3(%arg0: i32) -> (i32, i32) {
    %c0_i32 = arith.constant 0 : i32
    %c0_i32_0 = arith.constant 0 : i32
    %c0_i32_1 = arith.constant 0 : i32
    return %c0_i32, %c0_i32_0 : i32, i32
  }
  func.func @transform_4(%arg0: i32) -> (i32, i32) {
    %c0_i32 = arith.constant 0 : i32
    %c0_i32_0 = arith.constant 0 : i32
    %c0_i32_1 = arith.constant 0 : i32
    return %c0_i32, %c0_i32_0 : i32, i32
  }
  func.func @transform_5(%arg0: i32) -> (i32, i32) {
    %c0_i32 = arith.constant 0 : i32
    %c0_i32_0 = arith.constant 0 : i32
    %c0_i32_1 = arith.constant 0 : i32
    return %c0_i32, %c0_i32_0 : i32, i32
  }
  func.func @transform_6(%arg0: i32) -> (i32, i32) {
    %c0_i32 = arith.constant 0 : i32
    %c0_i32_0 = arith.constant 0 : i32
    return %c0_i32, %arg0 : i32, i32
  }
}

</mosaic_0001>

<llo_original>
// kernel: tpu_custom_call.1
$region0: #{tpu_custom_call.1}
  #allocation0 [shape = 'u32[]', space=smem, size = 0x4, offset = 0x4, fixed_abs, tag = 'smem constant byte address 0x4 - core index']
  #allocation1 [shape = 'u32[144,128]{1,0:T(1,128)}', space=vmem, size = 0x12000, scoped, tag = 'internal scratch']
  %s0 = inlined_call_operand.vmem [shape: f32[3,256], index: 0, kind: input, shape index: {}]
  %s1 = inlined_call_operand.vmem [shape: f32[32,3], index: 1, kind: input, shape index: {}]
  %s2 = inlined_call_operand.vmem [shape: f32[32,1], index: 2, kind: input, shape index: {}]
  %s3 = inlined_call_operand.vmem [shape: f32[32,3], index: 3, kind: input, shape index: {}]
  %s4 = inlined_call_operand.vmem [shape: f32[32,1], index: 4, kind: input, shape index: {}]
  %s5 = inlined_call_operand.vmem [shape: f32[4,32], index: 5, kind: input, shape index: {}]
  %s6 = inlined_call_operand.hbm [shape: f32[3,256], index: 6, kind: output, shape index: {}]
  %s7 = sld [smem:[#allocation0]]
  $region34: #{tpu_custom_call.1} parent=0
    _
  %s9 = ssub.s32 1, %s7
  %s10 = scalar_select 0, %s9, %s7
  $region1: #{tpu_custom_call.1} parent=0
    #allocation2 [shape = 'u8[4096]{0}', space=vmem, size = 0x1000, scoped, tag = 'output window, operand 0, single buffered']
    #allocation3 [shape = 's32[1]{0}', space=sflag, size = 0x4, scoped, tag = 'scoped memory for tpu_custom_call.1']
    %11 = vsyncpa [#allocation3], 0
    // Predicated region
    $region2: #{tpu_custom_call.1} parent=1 // pred_check
      _
    $region3: #{tpu_custom_call.1} parent=1 // pred_check_branch
      %13 = sbr.rel (0) target = $region5
    $region4: #{tpu_custom_call.1} parent=1 // pred_region
      _
    $region5: #{tpu_custom_call.1} parent=1 // pred_fallthru
      _
    // Predicated region
    $region6: #{tpu_custom_call.1} parent=1 // pred_check
      _
    $region7: #{tpu_custom_call.1} parent=1 // pred_check_branch
      %15 = sbr.rel (0) target = $region9
    $region8: #{tpu_custom_call.1} parent=1 // pred_region
      _
    $region9: #{tpu_custom_call.1} parent=1 // pred_fallthru
      _
    // Predicated region
    $region10: #{tpu_custom_call.1} parent=1 // pred_check
      _
    $region11: #{tpu_custom_call.1} parent=1 // pred_check_branch
      %17 = sbr.rel (0) target = $region13
    $region12: #{tpu_custom_call.1} parent=1 // pred_region
      _
    $region13: #{tpu_custom_call.1} parent=1 // pred_fallthru
      _
    // Predicated region
    $region14: #{tpu_custom_call.1} parent=1 // pred_check
      _
    $region15: #{tpu_custom_call.1} parent=1 // pred_check_branch
      %19 = sbr.rel (0) target = $region17
    $region16: #{tpu_custom_call.1} parent=1 // pred_region
      _
    $region17: #{tpu_custom_call.1} parent=1 // pred_fallthru
      _
    // Predicated region
    $region18: #{tpu_custom_call.1} parent=1 // pred_check
      _
    $region19: #{tpu_custom_call.1} parent=1 // pred_check_branch
      %21 = sbr.rel (0) target = $region21
    $region20: #{tpu_custom_call.1} parent=1 // pred_region
      _
    $region21: #{tpu_custom_call.1} parent=1 // pred_fallthru
      _
    // Predicated region
    $region22: #{tpu_custom_call.1} parent=1 // pred_check
      _
    $region23: #{tpu_custom_call.1} parent=1 // pred_check_branch
      %23 = sbr.rel (0) target = $region25
    $region24: #{tpu_custom_call.1} parent=1 // pred_region
      _
    $region25: #{tpu_custom_call.1} parent=1 // pred_fallthru
      _
    %v24 = vld [vmem:[%s0] sm:$0x77]
    %v25 = vld [vmem:[%s1] sm:$0xff]
    %v26 = vld [vmem:[%s1 + $0x8] sm:$0xff]
    %v27 = vld [vmem:[%s1 + $0x10] sm:$0xff]
    %v28 = vld [vmem:[%s1 + $0x18] sm:$0xff]
    %v29 = vld [vmem:[%s2] sm:$0xff]
    %v30 = vld [vmem:[%s2 + $0x8] sm:$0xff]
    %v31 = vld [vmem:[%s2 + $0x10] sm:$0xff]
    %v32 = vld [vmem:[%s2 + $0x18] sm:$0xff]
    %34 = vset.pattern.permute.xlu0 0
    %35 = vperm.xlu0 %34, %v29
    %v36 = vpop.permute.xlu0 %35
    %39 = vset.pattern.permute.xlu0 0
    %40 = vperm.xlu0 %39, %v30
    %v41 = vpop.permute.xlu0 %40
    %44 = vset.pattern.permute.xlu0 0
    %45 = vperm.xlu0 %44, %v31
    %v46 = vpop.permute.xlu0 %45
    %49 = vset.pattern.permute.xlu0 0
    %50 = vperm.xlu0 %49, %v32
    %v51 = vpop.permute.xlu0 %50
    %v54 = vcombine.high %v24, %v24
    %vm55 = vcmask 23552
    %v57 = vsel %vm55, %v25, 0
    %v60 = vsel %vm55, %v26, 0
    %v63 = vsel %vm55, %v27, 0
    %v66 = vsel %vm55, %v28, 0
    %vm68 = vcmask 1042432
    %v69 = vsel %vm68, %v24, 0
    %v71 = vsel %vm68, %v54, 0
    %73 = vmatprep.subr.mxu0 %v71
    %74 = vmatpush1.msra.mxu0 %v69
    %75 = vmatprep.subr.mxu0 0.0
    %76 = vmatpush1.msra.mxu0 0.0
    %77 = vmatprep.subr.mxu0 0.0
    %78 = vmatpush1.msra.mxu0 0.0
    %79 = vmatprep.subr.mxu0 0.0
    %80 = vmatpush1.msra.mxu0 0.0
    %81 = vmatprep.subr.mxu0 0.0
    %82 = vmatpush1.msra.mxu0 0.0
    %83 = vmatprep.subr.mxu0 0.0
    %84 = vmatpush1.msra.mxu0 0.0
    %85 = vmatprep.subr.mxu0 0.0
    %86 = vmatpush1.msra.mxu0 0.0
    %87 = vmatprep.subr.mxu0 0.0
    %88 = vmatpush1.msra.mxu0 0.0
    %89 = vmatprep.subr.mxu0 0.0
    %90 = vmatpush1.msra.mxu0 0.0
    %91 = vmatprep.subr.mxu0 0.0
    %92 = vmatpush1.msra.mxu0 0.0
    %93 = vmatprep.subr.mxu0 0.0
    %94 = vmatpush1.msra.mxu0 0.0
    %95 = vmatprep.subr.mxu0 0.0
    %96 = vmatpush1.msra.mxu0 0.0
    %97 = vmatprep.subr.mxu0 0.0
    %98 = vmatpush1.msra.mxu0 0.0
    %99 = vmatprep.subr.mxu0 0.0
    %100 = vmatpush1.msra.mxu0 0.0
    %101 = vmatprep.subr.mxu0 0.0
    %102 = vmatpush1.msra.mxu0 0.0
    %103 = vmatprep.subr.mxu0 0.0
    %104 = vmatpush1.msra.mxu0 0.0
    %105 = vmatprep.subr.mxu0 0.0
    %106 = vmatpush1.msra.mxu0 0.0
    %107 = vmatprep.subr.mxu0 0.0
    %108 = vmatpush1.msra.mxu0 0.0
    %109 = vmatprep.subr.mxu0 0.0
    %110 = vmatpush1.msra.mxu0 0.0
    %111 = vmatprep.subr.mxu0 0.0
    %112 = vmatpush1.msra.mxu0 0.0
    %113 = vmatprep.subr.mxu0 0.0
    %114 = vmatpush1.msra.mxu0 0.0
    %115 = vmatprep.subr.mxu0 0.0
    %116 = vmatpush1.msra.mxu0 0.0
    %117 = vmatprep.subr.mxu0 0.0
    %118 = vmatpush1.msra.mxu0 0.0
    %119 = vmatprep.subr.mxu0 0.0
    %120 = vmatpush1.msra.mxu0 0.0
    %121 = vmatprep.subr.mxu0 0.0
    %122 = vmatpush1.msra.mxu0 0.0
    %123 = vmatprep.subr.mxu0 0.0
    %124 = vmatpush1.msra.mxu0 0.0
    %125 = vmatprep.subr.mxu0 0.0
    %126 = vmatpush1.msra.mxu0 0.0
    %127 = vmatprep.subr.mxu0 0.0
    %128 = vmatpush1.msra.mxu0 0.0
    %129 = vmatprep.subr.mxu0 0.0
    %130 = vmatpush1.msra.mxu0 0.0
    %131 = vmatprep.subr.mxu0 0.0
    %132 = vmatpush1.msra.mxu0 0.0
    %133 = vmatprep.subr.mxu0 0.0
    %134 = vmatpush1.msra.mxu0 0.0
    %135 = vmatprep.subr.mxu0 0.0
    %136 = vmatpush1.msra.mxu0 0.0
    %137 = vmatprep.mubr.f32.mxu0 0.0
    %138 = vmatmul.mubr.f32.gmra.mrb[0].mxu0 %v57
    %v139 = vpop.f32.mrb[0].mxu0
    %v140 = vadd.f32 %v36, %v139
    %v141 = vpop.f32.mrb[0].mxu0
    %v142 = vadd.f32 %v36, %v141
    %143 = vmatprep.mubr.f32.mxu0 0.0
    %144 = vmatmul.mubr.f32.gmra.mrb[0].mxu0 %v60
    %v145 = vpop.f32.mrb[0].mxu0
    %v146 = vadd.f32 %v41, %v145
    %v147 = vpop.f32.mrb[0].mxu0
    %v148 = vadd.f32 %v41, %v147
    %149 = vmatprep.mubr.f32.mxu0 0.0
    %150 = vmatmul.mubr.f32.gmra.mrb[0].mxu0 %v63
    %v151 = vpop.f32.mrb[0].mxu0
    %v152 = vadd.f32 %v46, %v151
    %v153 = vpop.f32.mrb[0].mxu0
    %v154 = vadd.f32 %v46, %v153
    %155 = vmatprep.mubr.f32.mxu0 0.0
    %156 = vmatmul.mubr.f32.gmra.mrb[0].mxu0 %v66
    %v157 = vpop.f32.mrb[0].mxu0
    %v158 = vadd.f32 %v51, %v157
    %v159 = vpop.f32.mrb[0].mxu0
    %v160 = vadd.f32 %v51, %v159
    %161 = vdwg.mxu0
    %v162 = vld [vmem:[%s3] sm:$0xff]
    %v163 = vld [vmem:[%s3 + $0x8] sm:$0xff]
    %v164 = vld [vmem:[%s3 + $0x10] sm:$0xff]
    %v165 = vld [vmem:[%s3 + $0x18] sm:$0xff]
    %v166 = vld [vmem:[%s4] sm:$0xff]
    %v167 = vld [vmem:[%s4 + $0x8] sm:$0xff]
    %v168 = vld [vmem:[%s4 + $0x10] sm:$0xff]
    %v169 = vld [vmem:[%s4 + $0x18] sm:$0xff]
    %171 = vset.pattern.permute.xlu0 0
    %172 = vperm.xlu0 %171, %v166
    %v173 = vpop.permute.xlu0 %172
    %176 = vset.pattern.permute.xlu0 0
    %177 = vperm.xlu0 %176, %v167
    %v178 = vpop.permute.xlu0 %177
    %181 = vset.pattern.permute.xlu0 0
    %182 = vperm.xlu0 %181, %v168
    %v183 = vpop.permute.xlu0 %182
    %186 = vset.pattern.permute.xlu0 0
    %187 = vperm.xlu0 %186, %v169
    %v188 = vpop.permute.xlu0 %187
    %v191 = vsel %vm55, %v162, 0
    %v194 = vsel %vm55, %v163, 0
    %v197 = vsel %vm55, %v164, 0
    %v200 = vsel %vm55, %v165, 0
    %202 = vmatprep.subr.mxu0 %v71
    %203 = vmatpush1.msra.mxu0 %v69
    %204 = vmatprep.subr.mxu0 0.0
    %205 = vmatpush1.msra.mxu0 0.0
    %206 = vmatprep.subr.mxu0 0.0
    %207 = vmatpush1.msra.mxu0 0.0
    %208 = vmatprep.subr.mxu0 0.0
    %209 = vmatpush1.msra.mxu0 0.0
    %210 = vmatprep.subr.mxu0 0.0
    %211 = vmatpush1.msra.mxu0 0.0
    %212 = vmatprep.subr.mxu0 0.0
    %213 = vmatpush1.msra.mxu0 0.0
    %214 = vmatprep.subr.mxu0 0.0
    %215 = vmatpush1.msra.mxu0 0.0
    %216 = vmatprep.subr.mxu0 0.0
    %217 = vmatpush1.msra.mxu0 0.0
    %218 = vmatprep.subr.mxu0 0.0
    %219 = vmatpush1.msra.mxu0 0.0
    %220 = vmatprep.subr.mxu0 0.0
    %221 = vmatpush1.msra.mxu0 0.0
    %222 = vmatprep.subr.mxu0 0.0
    %223 = vmatpush1.msra.mxu0 0.0
    %224 = vmatprep.subr.mxu0 0.0
    %225 = vmatpush1.msra.mxu0 0.0
    %226 = vmatprep.subr.mxu0 0.0
    %227 = vmatpush1.msra.mxu0 0.0
    %228 = vmatprep.subr.mxu0 0.0
    %229 = vmatpush1.msra.mxu0 0.0
    %230 = vmatprep.subr.mxu0 0.0
    %231 = vmatpush1.msra.mxu0 0.0
    %232 = vmatprep.subr.mxu0 0.0
    %233 = vmatpush1.msra.mxu0 0.0
    %234 = vmatprep.subr.mxu0 0.0
    %235 = vmatpush1.msra.mxu0 0.0
    %236 = vmatprep.subr.mxu0 0.0
    %237 = vmatpush1.msra.mxu0 0.0
    %238 = vmatprep.subr.mxu0 0.0
    %239 = vmatpush1.msra.mxu0 0.0
    %240 = vmatprep.subr.mxu0 0.0
    %241 = vmatpush1.msra.mxu0 0.0
    %242 = vmatprep.subr.mxu0 0.0
    %243 = vmatpush1.msra.mxu0 0.0
    %244 = vmatprep.subr.mxu0 0.0
    %245 = vmatpush1.msra.mxu0 0.0
    %246 = vmatprep.subr.mxu0 0.0
    %247 = vmatpush1.msra.mxu0 0.0
    %248 = vmatprep.subr.mxu0 0.0
    %249 = vmatpush1.msra.mxu0 0.0
    %250 = vmatprep.subr.mxu0 0.0
    %251 = vmatpush1.msra.mxu0 0.0
    %252 = vmatprep.subr.mxu0 0.0
    %253 = vmatpush1.msra.mxu0 0.0
    %254 = vmatprep.subr.mxu0 0.0
    %255 = vmatpush1.msra.mxu0 0.0
    %256 = vmatprep.subr.mxu0 0.0
    %257 = vmatpush1.msra.mxu0 0.0
    %258 = vmatprep.subr.mxu0 0.0
    %259 = vmatpush1.msra.mxu0 0.0
    %260 = vmatprep.subr.mxu0 0.0
    %261 = vmatpush1.msra.mxu0 0.0
    %262 = vmatprep.subr.mxu0 0.0
    %263 = vmatpush1.msra.mxu0 0.0
    %264 = vmatprep.subr.mxu0 0.0
    %265 = vmatpush1.msra.mxu0 0.0
    %266 = vmatprep.mubr.f32.mxu0 0.0
    %267 = vmatmul.mubr.f32.gmra.mrb[0].mxu0 %v191
    %v268 = vpop.f32.mrb[0].mxu0
    %v269 = vadd.f32 %v173, %v268
    %v270 = vpop.f32.mrb[0].mxu0
    %v271 = vadd.f32 %v173, %v270
    %272 = vmatprep.mubr.f32.mxu0 0.0
    %273 = vmatmul.mubr.f32.gmra.mrb[0].mxu0 %v194
    %v274 = vpop.f32.mrb[0].mxu0
    %v275 = vadd.f32 %v178, %v274
    %v276 = vpop.f32.mrb[0].mxu0
    %v277 = vadd.f32 %v178, %v276
    %278 = vmatprep.mubr.f32.mxu0 0.0
    %279 = vmatmul.mubr.f32.gmra.mrb[0].mxu0 %v197
    %v280 = vpop.f32.mrb[0].mxu0
    %v281 = vadd.f32 %v183, %v280
    %v282 = vpop.f32.mrb[0].mxu0
    %v283 = vadd.f32 %v183, %v282
    %284 = vmatprep.mubr.f32.mxu0 0.0
    %285 = vmatmul.mubr.f32.gmra.mrb[0].mxu0 %v200
    %v286 = vpop.f32.mrb[0].mxu0
    %v287 = vadd.f32 %v188, %v286
    %v288 = vpop.f32.mrb[0].mxu0
    %v289 = vadd.f32 %v188, %v288
    %290 = vdwg.mxu0
    %v291 = vmul.f32 %v269, %v269
    %v292 = vmul.f32 %v271, %v271
    %v293 = vmul.f32 %v275, %v275
    %v294 = vmul.f32 %v277, %v277
    %v295 = vmul.f32 %v281, %v281
    %v296 = vmul.f32 %v283, %v283
    %v297 = vmul.f32 %v287, %v287
    %v298 = vmul.f32 %v289, %v289
    %v299 = vmul.f32 %v269, %v291
    %v300 = vmul.f32 %v271, %v292
    %v301 = vmul.f32 %v275, %v293
    %v302 = vmul.f32 %v277, %v294
    %v303 = vmul.f32 %v281, %v295
    %v304 = vmul.f32 %v283, %v296
    %v305 = vmul.f32 %v287, %v297
    %v306 = vmul.f32 %v289, %v298
    %v307 = vmul.f32 %v299, 0.044715
    %v308 = vmul.f32 %v300, 0.044715
    %v309 = vmul.f32 %v301, 0.044715
    %v310 = vmul.f32 %v302, 0.044715
    %v311 = vmul.f32 %v303, 0.044715
    %v312 = vmul.f32 %v304, 0.044715
    %v313 = vmul.f32 %v305, 0.044715
    %v314 = vmul.f32 %v306, 0.044715
    %v315 = vadd.f32 %v269, %v307
    %v316 = vadd.f32 %v271, %v308
    %v317 = vadd.f32 %v275, %v309
    %v318 = vadd.f32 %v277, %v310
    %v319 = vadd.f32 %v281, %v311
    %v320 = vadd.f32 %v283, %v312
    %v321 = vadd.f32 %v287, %v313
    %v322 = vadd.f32 %v289, %v314
    %v323 = vmul.f32 %v315, 0.7978846
    %v324 = vmul.f32 %v316, 0.7978846
    %v325 = vmul.f32 %v317, 0.7978846
    %v326 = vmul.f32 %v318, 0.7978846
    %v327 = vmul.f32 %v319, 0.7978846
    %v328 = vmul.f32 %v320, 0.7978846
    %v329 = vmul.f32 %v321, 0.7978846
    %v330 = vmul.f32 %v322, 0.7978846
    %v331 = vtanh.pop %v323
    %v332 = vtanh.pop %v324
    %v333 = vtanh.pop %v325
    %v334 = vtanh.pop %v326
    %v335 = vtanh.pop %v327
    %v336 = vtanh.pop %v328
    %v337 = vtanh.pop %v329
    %v338 = vtanh.pop %v330
    %v339 = vadd.f32 %v331, 1.0
    %v340 = vadd.f32 %v332, 1.0
    %v341 = vadd.f32 %v333, 1.0
    %v342 = vadd.f32 %v334, 1.0
    %v343 = vadd.f32 %v335, 1.0
    %v344 = vadd.f32 %v336, 1.0
    %v345 = vadd.f32 %v337, 1.0
    %v346 = vadd.f32 %v338, 1.0
    %v347 = vmul.f32 %v339, 0.5
    %v348 = vmul.f32 %v340, 0.5
    %v349 = vmul.f32 %v341, 0.5
    %v350 = vmul.f32 %v342, 0.5
    %v351 = vmul.f32 %v343, 0.5
    %v352 = vmul.f32 %v344, 0.5
    %v353 = vmul.f32 %v345, 0.5
    %v354 = vmul.f32 %v346, 0.5
    %v355 = vmul.f32 %v269, %v347
    %v356 = vmul.f32 %v271, %v348
    %v357 = vmul.f32 %v275, %v349
    %v358 = vmul.f32 %v277, %v350
    %v359 = vmul.f32 %v281, %v351
    %v360 = vmul.f32 %v283, %v352
    %v361 = vmul.f32 %v287, %v353
    %v362 = vmul.f32 %v289, %v354
    %v363 = vmul.f32 %v355, %v140
    %v364 = vmul.f32 %v356, %v142
    %v365 = vmul.f32 %v357, %v146
    %v366 = vmul.f32 %v358, %v148
    %v367 = vmul.f32 %v359, %v152
    %v368 = vmul.f32 %v360, %v154
    %v369 = vmul.f32 %v361, %v158
    %v370 = vmul.f32 %v362, %v160
    %v371 = vld [vmem:[%s5] sm:$0xf]
    %vm372 = vcmask 261120
    %v374 = vsel %vm372, %v371, 0
    %376 = vmatprep.subr.mxu0 %v364
    %377 = vmatpush1.msra.mxu0 %v363
    %378 = vmatprep.subr.mxu0 %v366
    %379 = vmatpush1.msra.mxu0 %v365
    %380 = vmatprep.subr.mxu0 %v368
    %381 = vmatpush1.msra.mxu0 %v367
    %382 = vmatprep.subr.mxu0 %v370
    %383 = vmatpush1.msra.mxu0 %v369
    %384 = vmatprep.subr.mxu0 0.0
    %385 = vmatpush1.msra.mxu0 0.0
    %386 = vmatprep.subr.mxu0 0.0
    %387 = vmatpush1.msra.mxu0 0.0
    %388 = vmatprep.subr.mxu0 0.0
    %389 = vmatpush1.msra.mxu0 0.0
    %390 = vmatprep.subr.mxu0 0.0
    %391 = vmatpush1.msra.mxu0 0.0
    %392 = vmatprep.subr.mxu0 0.0
    %393 = vmatpush1.msra.mxu0 0.0
    %394 = vmatprep.subr.mxu0 0.0
    %395 = vmatpush1.msra.mxu0 0.0
    %396 = vmatprep.subr.mxu0 0.0
    %397 = vmatpush1.msra.mxu0 0.0
    %398 = vmatprep.subr.mxu0 0.0
    %399 = vmatpush1.msra.mxu0 0.0
    %400 = vmatprep.subr.mxu0 0.0
    %401 = vmatpush1.msra.mxu0 0.0
    %402 = vmatprep.subr.mxu0 0.0
    %403 = vmatpush1.msra.mxu0 0.0
    %404 = vmatprep.subr.mxu0 0.0
    %405 = vmatpush1.msra.mxu0 0.0
    %406 = vmatprep.subr.mxu0 0.0
    %407 = vmatpush1.msra.mxu0 0.0
    %408 = vmatprep.subr.mxu0 0.0
    %409 = vmatpush1.msra.mxu0 0.0
    %410 = vmatprep.subr.mxu0 0.0
    %411 = vmatpush1.msra.mxu0 0.0
    %412 = vmatprep.subr.mxu0 0.0
    %413 = vmatpush1.msra.mxu0 0.0
    %414 = vmatprep.subr.mxu0 0.0
    %415 = vmatpush1.msra.mxu0 0.0
    %416 = vmatprep.subr.mxu0 0.0
    %417 = vmatpush1.msra.mxu0 0.0
    %418 = vmatprep.subr.mxu0 0.0
    %419 = vmatpush1.msra.mxu0 0.0
    %420 = vmatprep.subr.mxu0 0.0
    %421 = vmatpush1.msra.mxu0 0.0
    %422 = vmatprep.subr.mxu0 0.0
    %423 = vmatpush1.msra.mxu0 0.0
    %424 = vmatprep.subr.mxu0 0.0
    %425 = vmatpush1.msra.mxu0 0.0
    %426 = vmatprep.subr.mxu0 0.0
    %427 = vmatpush1.msra.mxu0 0.0
    %428 = vmatprep.subr.mxu0 0.0
    %429 = vmatpush1.msra.mxu0 0.0
    %430 = vmatprep.subr.mxu0 0.0
    %431 = vmatpush1.msra.mxu0 0.0
    %432 = vmatprep.subr.mxu0 0.0
    %433 = vmatpush1.msra.mxu0 0.0
    %434 = vmatprep.subr.mxu0 0.0
    %435 = vmatpush1.msra.mxu0 0.0
    %436 = vmatprep.subr.mxu0 0.0
    %437 = vmatpush1.msra.mxu0 0.0
    %438 = vmatprep.subr.mxu0 0.0
    %439 = vmatpush1.msra.mxu0 0.0
    %440 = vmatprep.mubr.f32.mxu0 0.0
    %441 = vmatmul.mubr.f32.gmra.mrb[0].mxu0 %v374
    %v442 = vpop.f32.mrb[0].mxu0
    %v443 = vadd.f32 0.0, %v442
    %v444 = vpop.f32.mrb[0].mxu0
    %v445 = vadd.f32 0.0, %v444
    %446 = vdwg.mxu0
    %v447 = vand.u32 2147483647, %v443
    %v448 = vand.u32 2147483647, %v445
    %vm449 = vcmp.gt.f32.partialorder %v447, 0.001
    %vm450 = vcmp.gt.f32.partialorder %v448, 0.001
    %v451 = vsel %vm449, %v443, 0.001
    %v452 = vsel %vm450, %v445, 0.001
    %v453 = vlaneseq
    %v454 = vshrl.u32 %v453, 7
    %v455 = vsub.s32 3, %v454
    %v456 = vrot.slane %v451, %v455
    %v457 = vlaneseq
    %v458 = vshrl.u32 %v457, 7
    %v459 = vsub.s32 3, %v458
    %v460 = vrot.slane %v452, %v459
    %v461 = vrcp.pop %v456
    %v462 = vmul.f32 %v443, %v461
    %v463 = vrcp.pop %v460
    %v464 = vmul.f32 %v445, %v463
    %v467 = vcombine.low %v462, %v464
    %469 = vst [vmem:[#allocation2] sm:$0x77] %v467
    // Predicated region
    $region26: #{tpu_custom_call.1} parent=1 // pred_check
      _
    $region27: #{tpu_custom_call.1} parent=1 // pred_check_branch
      %471 = sbr.rel (0) target = $region29
    $region28: #{tpu_custom_call.1} parent=1 // pred_region
      %s473 = ssub.s32 128, 128
      %474 = vsyncadd [#allocation3], %s473
      %s476 = sshll.u32 [#allocation2], 4
      %s477 = int_to_ptr.vmem [resolvable:$true] %s476
      %479 = dma.vmem_to_hbm [thread:$0]  %s477, 128, %s6, [#allocation3]
    $region29: #{tpu_custom_call.1} parent=1 // pred_fallthru
      _
    // Predicated region
    $region30: #{tpu_custom_call.1} parent=1 // pred_check
      _
    $region31: #{tpu_custom_call.1} parent=1 // pred_check_branch
      %481 = sbr.rel (0) target = $region33
    $region32: #{tpu_custom_call.1} parent=1 // pred_region
      %482 = dma.done [#allocation3], 128
    $region33: #{tpu_custom_call.1} parent=1 // pred_fallthru
      _
    %483 = vsyncpa [#allocation3], 1

</llo_original>
